<compile_context>
chip_gen: v7x
topology: tpu7x:2x2x1
jax: 0.10.0
libtpu: 0.0.40
codegen_flags: <defaults>
</compile_context>

<pallas_src>
import functools

import jax
import jax.numpy as jnp
from jax.experimental import pallas as pl
from jax.experimental.pallas import tpu as pltpu

_LANES = 128
_SUBLANES = 8
_MAX_BLOCK_ROWS = 4096  # 2 MiB per input block (f32) -> 8 MiB double-buffered


def _rmse_kernel(yhat_ref, y_ref, out_ref, acc_ref, *, block_rows, total_rows,
                 needs_mask, inv_count, eps):
    """Accumulates sum((yhat - y)^2) into an (8,128) VMEM vreg; finalizes sqrt(mean+eps)."""
    i = pl.program_id(0)

    @pl.when(i == 0)
    def _init():
        acc_ref[...] = jnp.zeros_like(acc_ref)

    d = yhat_ref[...].astype(jnp.float32) - y_ref[...].astype(jnp.float32)
    sq = d * d

    if needs_mask:
        # Last block extends past the end of the (rows, 128) array: zero out
        # the out-of-range rows (their contents are unspecified; jnp.where
        # also guards against NaN/Inf garbage leaking into the sum).
        row = i * block_rows + jax.lax.broadcasted_iota(
            jnp.int32, (block_rows, _LANES), 0)
        sq = jnp.where(row < total_rows, sq, 0.0)

    # Fold the row-tile axis with pure element-wise (VPU) adds; no cross-lane
    # work and no scalar round-trip on the per-step critical path.
    acc_ref[...] += jnp.sum(
        sq.reshape(block_rows // _SUBLANES, _SUBLANES, _LANES), axis=0)

    @pl.when(i == pl.num_programs(0) - 1)
    def _finalize():
        s = jnp.sum(acc_ref[...], axis=1, keepdims=True)   # (8, 1) cross-lane (XLU)
        s = jnp.sum(s, axis=0, keepdims=True)               # (1, 1)
        out_ref[...] = jnp.sqrt(s * inv_count + eps)


def _round_up(x, m):
    return (x + m - 1) // m * m


def rmse_loss(yhat: jax.Array, y: jax.Array, eps: float = 1e-6) -> jax.Array:
    assert yhat.shape == y.shape, "yhat and y must have the same shape"
    n_elems = yhat.size

    yhat_flat = yhat.reshape(-1)
    y_flat = y.reshape(-1)

    # Common case: total size is a multiple of 128, so the reshape below is a
    # free bitcast (no HBM copy, no dtype change).  Otherwise pad only the
    # last partial lane row with zeros (zero diff -> contributes 0 to sum).
    rem = n_elems % _LANES
    if rem:
        pad = _LANES - rem
        yhat_flat = jnp.pad(yhat_flat, (0, pad))
        y_flat = jnp.pad(y_flat, (0, pad))

    rows = yhat_flat.size // _LANES
    yhat2d = yhat_flat.reshape(rows, _LANES)
    y2d = y_flat.reshape(rows, _LANES)

    # Biggest block that fits comfortably in VMEM; always a multiple of 8 rows.
    block_rows = min(_MAX_BLOCK_ROWS, _round_up(rows, _SUBLANES))
    grid_len = pl.cdiv(rows, block_rows)
    needs_mask = (rows % block_rows) != 0

    kernel = functools.partial(
        _rmse_kernel,
        block_rows=block_rows,
        total_rows=rows,
        needs_mask=needs_mask,
        inv_count=float(1.0 / n_elems),
        eps=float(eps),
    )

    out = pl.pallas_call(
        kernel,
        out_shape=jax.ShapeDtypeStruct((1, 1), jnp.float32),
        grid_spec=pltpu.PrefetchScalarGridSpec(
            num_scalar_prefetch=0,
            grid=(grid_len,),
            in_specs=[
                pl.BlockSpec((block_rows, _LANES), lambda i: (i, 0)),
                pl.BlockSpec((block_rows, _LANES), lambda i: (i, 0)),
            ],
            out_specs=pl.BlockSpec((1, 1), lambda i: (0, 0)),
            scratch_shapes=[pltpu.VMEM((_SUBLANES, _LANES), jnp.float32)],
        ),
        compiler_params=pltpu.CompilerParams(
            dimension_semantics=("arbitrary",),  # sequential reduction over tiles
        ),
    )(yhat2d, y2d)

    return out[0, 0]  # scalar, matching torch's 0-d loss tensor


if __name__ == "__main__":
    key = jax.random.PRNGKey(0)
    k1, k2 = jax.random.split(key)

    # Small NCHW-shaped example inputs (batch=2, channels=4, spatial=16x16).
    yhat = jax.random.normal(k1, (2, 4, 16, 16), dtype=jnp.float32)
    y = jax.random.normal(k2, (2, 4, 16, 16), dtype=jnp.float32)

    loss = rmse_loss(yhat, y, eps=1e-6)
    loss = jax.block_until_ready(loss)

    # Cross-check against a pure-JAX reference of the PyTorch semantics.
    ref = jnp.sqrt(jnp.mean((yhat - y) ** 2) + 1e-6)
    assert jnp.allclose(loss, ref, rtol=1e-5, atol=1e-6), (loss, ref)

    print("KERNEL_OK")
</pallas_src>

<mosaic_0001>
module attributes {stable_mosaic.version = 11 : i64} {
  func.func @_rmse_kernel(%arg0: i32, %arg1: memref<16x128xf32, #tpu.memory_space<vmem>>, %arg2: memref<16x128xf32, #tpu.memory_space<vmem>>, %arg3: memref<1x1xf32, #tpu.memory_space<vmem>>, %arg4: memref<8x128xf32, #tpu.memory_space<vmem>>) attributes {dimension_semantics = [#tpu.dimension_semantics<arbitrary>], iteration_bounds = array<i64: 1>, scalar_prefetch = 0 : i64, scratch_operands = 1 : i64, tpu.core_type = #tpu.core_type<tc>, window_params = [{transform_indices = @transform_0, window_bounds = array<i64: 16, 128>}, {transform_indices = @transform_1, window_bounds = array<i64: 16, 128>}, {pipeline_mode = #tpu.pipeline_mode<synchronous>, transform_indices = @transform_2, window_bounds = array<i64: 1, 1>}]} {
    %c0_i32 = arith.constant 0 : i32
    %0 = arith.cmpi eq, %arg0, %c0_i32 : i32
    %1 = arith.extui %0 : i1 to i32
    %c0_i32_0 = arith.constant 0 : i32
    %2 = arith.cmpi ne, %1, %c0_i32_0 : i32
    scf.if %2 {
      %cst_10 = arith.constant 0.000000e+00 : f32
      %15 = vector.broadcast %cst_10 : f32 to vector<8x128xf32>
      %c0_11 = arith.constant 0 : index
      %c0_12 = arith.constant 0 : index
      %16 = vector.load %arg4[%c0_11, %c0_12] : memref<8x128xf32, #tpu.memory_space<vmem>>, vector<8x128xf32>
      tpu.vector_store %arg4[%c0_11, %c0_12], %15 {strides = array<i32>} : memref<8x128xf32, #tpu.memory_space<vmem>>, vector<8x128xf32>,
    } else {
    }
    %c0 = arith.constant 0 : index
    %c0_1 = arith.constant 0 : index
    %3 = vector.load %arg1[%c0, %c0_1] : memref<16x128xf32, #tpu.memory_space<vmem>>, vector<16x128xf32>
    %c0_2 = arith.constant 0 : index
    %c0_3 = arith.constant 0 : index
    %4 = vector.load %arg2[%c0_2, %c0_3] : memref<16x128xf32, #tpu.memory_space<vmem>>, vector<16x128xf32>
    %5 = arith.subf %3, %4 : vector<16x128xf32>
    %6 = arith.mulf %5, %5 : vector<16x128xf32>
    %c0_4 = arith.constant 0 : index
    %c0_5 = arith.constant 0 : index
    %7 = vector.load %arg4[%c0_4, %c0_5] : memref<8x128xf32, #tpu.memory_space<vmem>>, vector<8x128xf32>
    %8 = vector.shape_cast %6 : vector<16x128xf32> to vector<2x8x128xf32>
    %cst = arith.constant dense<0.000000e+00> : vector<8x128xf32>
    %9 = vector.multi_reduction <add>, %8, %cst [0] : vector<2x8x128xf32> to vector<8x128xf32>
    %10 = arith.addf %7, %9 : vector<8x128xf32>
    %c0_6 = arith.constant 0 : index
    %c0_7 = arith.constant 0 : index
    %11 = vector.load %arg4[%c0_6, %c0_7] : memref<8x128xf32, #tpu.memory_space<vmem>>, vector<8x128xf32>
    tpu.vector_store %arg4[%c0_6, %c0_7], %10 {strides = array<i32>} : memref<8x128xf32, #tpu.memory_space<vmem>>, vector<8x128xf32>,
    %c0_i32_8 = arith.constant 0 : i32
    %12 = arith.cmpi eq, %arg0, %c0_i32_8 : i32
    %13 = arith.extui %12 : i1 to i32
    %c0_i32_9 = arith.constant 0 : i32
    %14 = arith.cmpi ne, %13, %c0_i32_9 : i32
    scf.if %14 {
      %c0_10 = arith.constant 0 : index
      %c0_11 = arith.constant 0 : index
      %15 = vector.load %arg4[%c0_10, %c0_11] : memref<8x128xf32, #tpu.memory_space<vmem>>, vector<8x128xf32>
      %cst_12 = arith.constant dense<0.000000e+00> : vector<8xf32>
      %16 = vector.multi_reduction <add>, %15, %cst_12 [1] : vector<8x128xf32> to vector<8xf32>
      %17 = vector.shape_cast %16 : vector<8xf32> to vector<8x1xf32>
      %cst_13 = arith.constant dense<0.000000e+00> : vector<1xf32>
      %18 = vector.multi_reduction <add>, %17, %cst_13 [0] : vector<8x1xf32> to vector<1xf32>
      %19 = vector.shape_cast %18 : vector<1xf32> to vector<1x1xf32>
      %cst_14 = arith.constant 4.8828125E-4 : f32
      %20 = vector.broadcast %cst_14 : f32 to vector<1x1xf32>
      %21 = arith.mulf %19, %20 : vector<1x1xf32>
      %cst_15 = arith.constant 9.99999997E-7 : f32
      %22 = vector.broadcast %cst_15 : f32 to vector<1x1xf32>
      %23 = arith.addf %21, %22 : vector<1x1xf32>
      %24 = math.sqrt %23 : vector<1x1xf32>
      %c0_16 = arith.constant 0 : index
      %c0_17 = arith.constant 0 : index
      %25 = vector.load %arg3[%c0_16, %c0_17] : memref<1x1xf32, #tpu.memory_space<vmem>>, vector<1x1xf32>
      tpu.vector_store %arg3[%c0_16, %c0_17], %24 {strides = array<i32>} : memref<1x1xf32, #tpu.memory_space<vmem>>, vector<1x1xf32>,
    } else {
    }
    return
  }
  func.func @transform_0(%arg0: i32) -> (i32, i32) {
    %c0_i32 = arith.constant 0 : i32
    %c0_i32_0 = arith.constant 0 : i32
    return %arg0, %c0_i32 : i32, i32
  }
  func.func @transform_1(%arg0: i32) -> (i32, i32) {
    %c0_i32 = arith.constant 0 : i32
    %c0_i32_0 = arith.constant 0 : i32
    return %arg0, %c0_i32 : i32, i32
  }
  func.func @transform_2(%arg0: i32) -> (i32, i32) {
    %c0_i32 = arith.constant 0 : i32
    %c0_i32_0 = arith.constant 0 : i32
    %c0_i32_1 = arith.constant 0 : i32
    return %c0_i32, %c0_i32_0 : i32, i32
  }
}

</mosaic_0001>

<llo_original>
// kernel: tpu_custom_call.1
$region0: #{tpu_custom_call.1}
  #allocation0 [shape = 'u32[]', space=smem, size = 0x4, offset = 0x4, fixed_abs, tag = 'smem constant byte address 0x4 - core index']
  #allocation1 [shape = 'u32[144,128]{1,0:T(1,128)}', space=vmem, size = 0x12000, scoped, tag = 'internal scratch']
  #allocation2 [shape = 'f32[8,128]{1,0:T(8,128)}', space=vmem, size = 0x1000, scoped, tag = 'scratch operand']
  %s0 = inlined_call_operand.hbm [shape: f32[16,128], index: 0, kind: input, shape index: {}]
  %s1 = inlined_call_operand.hbm [shape: f32[16,128], index: 1, kind: input, shape index: {}]
  %s2 = inlined_call_operand.hbm [shape: f32[1,1], index: 2, kind: output, shape index: {}]
  %s3 = sld [smem:[#allocation0]]
  $region34: #{tpu_custom_call.1} parent=0
    _
  %s5 = ssub.s32 1, %s3
  %s6 = scalar_select 0, %s5, %s3
  $region1: #{tpu_custom_call.1} parent=0
    #allocation3 [shape = 'u8[8192]{0}', space=vmem, size = 0x2000, scoped, tag = 'input window, operand 0, single buffered']
    #allocation4 [shape = 's32[1]{0}', space=sflag, size = 0x4, scoped, tag = 'scoped memory for tpu_custom_call.1']
    #allocation5 [shape = 's32[1]{0}', space=sflag, size = 0x4, scoped, tag = 'scoped memory for tpu_custom_call.1']
    #allocation6 [shape = 'u8[8192]{0}', space=vmem, size = 0x2000, scoped, tag = 'input window, operand 1, single buffered']
    #allocation7 [shape = 's32[1]{0}', space=sflag, size = 0x4, scoped, tag = 'scoped memory for tpu_custom_call.1']
    #allocation8 [shape = 'u8[512]{0}', space=vmem, size = 0x400, scoped, tag = 'output window, operand 0, single buffered']
    %7 = vsyncpa [#allocation4], 0
    %8 = vsyncpa [#allocation7], 0
    %9 = vsyncpa [#allocation5], 0
    // Predicated region
    $region2: #{tpu_custom_call.1} parent=1 // pred_check
      _
    $region3: #{tpu_custom_call.1} parent=1 // pred_check_branch
      %11 = sbr.rel (0) target = $region5
    $region4: #{tpu_custom_call.1} parent=1 // pred_region
      %s13 = ssub.s32 256, 256
      %14 = vsyncadd [#allocation4], %s13
      %s15 = sshll.u32 [#allocation3], 4
      %s16 = int_to_ptr.vmem [resolvable:$true] %s15
      %21 = dma.hbm_to_vmem [thread:$0]  %s0, 256, %s16, [#allocation4], 128, 128, 8
    $region5: #{tpu_custom_call.1} parent=1 // pred_fallthru
      _
    // Predicated region
    $region6: #{tpu_custom_call.1} parent=1 // pred_check
      _
    $region7: #{tpu_custom_call.1} parent=1 // pred_check_branch
      %23 = sbr.rel (0) target = $region9
    $region8: #{tpu_custom_call.1} parent=1 // pred_region
      %s25 = ssub.s32 256, 256
      %26 = vsyncadd [#allocation7], %s25
      %s27 = sshll.u32 [#allocation6], 4
      %s28 = int_to_ptr.vmem [resolvable:$true] %s27
      %33 = dma.hbm_to_vmem [thread:$0]  %s1, 256, %s28, [#allocation7], 128, 128, 8
    $region9: #{tpu_custom_call.1} parent=1 // pred_fallthru
      _
    // Predicated region
    $region10: #{tpu_custom_call.1} parent=1 // pred_check
      _
    $region11: #{tpu_custom_call.1} parent=1 // pred_check_branch
      %35 = sbr.rel (0) target = $region13
    $region12: #{tpu_custom_call.1} parent=1 // pred_region
      %36 = dma.done [#allocation4], 256
    $region13: #{tpu_custom_call.1} parent=1 // pred_fallthru
      _
    // Predicated region
    $region14: #{tpu_custom_call.1} parent=1 // pred_check
      _
    $region15: #{tpu_custom_call.1} parent=1 // pred_check_branch
      %38 = sbr.rel (0) target = $region17
    $region16: #{tpu_custom_call.1} parent=1 // pred_region
      %39 = dma.done [#allocation7], 256
    $region17: #{tpu_custom_call.1} parent=1 // pred_fallthru
      _
    %p40 = scmp.eq.s32.totalorder 0, 0
    // Predicated region
    $region18: #{tpu_custom_call.1} parent=1 // pred_check
      %p41 = pneg %p40
    $region19: #{tpu_custom_call.1} parent=1 // pred_check_branch
      %43 = sbr.rel (%p41) target = $region21
    $region20: #{tpu_custom_call.1} parent=1 // pred_region
      %44 = vst [vmem:[#allocation2] sm:$0xff] 0.0
    $region21: #{tpu_custom_call.1} parent=1 // pred_fallthru
      _
    %v45 = vld [vmem:[#allocation3] sm:$0xff]
    %v46 = vld [vmem:[#allocation3 + $0x8] sm:$0xff]
    %v47 = vld [vmem:[#allocation6] sm:$0xff]
    %v48 = vld [vmem:[#allocation6 + $0x8] sm:$0xff]
    %v49 = vsub.f32 %v45, %v47
    %v50 = vsub.f32 %v46, %v48
    %v51 = vmul.f32 %v49, %v49
    %v52 = vmul.f32 %v50, %v50
    %v53 = vld [vmem:[#allocation2] sm:$0xff]
    %v54 = vadd.f32 %v51, %v52
    %v55 = vadd.f32 %v53, %v54
    %56 = vst [vmem:[#allocation2] sm:$0xff] %v55
    // Predicated region
    $region22: #{tpu_custom_call.1} parent=1 // pred_check
      %p57 = pneg %p40
    $region23: #{tpu_custom_call.1} parent=1 // pred_check_branch
      %59 = sbr.rel (%p57) target = $region25
    $region24: #{tpu_custom_call.1} parent=1 // pred_region
      %v60 = vld [vmem:[#allocation2] sm:$0xff]
      %61 = vadd.xlane.f32.xlu0 %v60
      %v62 = vpop.xlane.xlu0 %61
      %v63 = vrot.slane %v62, 4
      %v64 = vadd.f32 %v62, %v63
      %v65 = vrot.slane %v64, 2
      %v66 = vadd.f32 %v64, %v65
      %v67 = vrot.slane %v66, 1
      %v68 = vadd.f32 %v66, %v67
      %v69 = vmul.f32 %v68, 0.00048828125
      %v70 = vadd.f32 %v69, 1e-06
      %v71 = vrsqrt.pop %v70
      %v72 = vmul.f32 %v70, %v71
      %vm73 = vcmp.eq.f32.partialorder %v70, inf
      %v74 = vsel %vm73, %v70, %v72
      %vm75 = vcmp.eq.f32.partialorder %v70, 0.0
      %v76 = vand.u32 %v70, 2147483648
      %v77 = vsel %vm75, %v76, %v74
      %vm78 = vcmask 0
      %79 = vst.msk [vmem:[#allocation8] sm:$0x1] %vm78, %v77
    $region25: #{tpu_custom_call.1} parent=1 // pred_fallthru
      _
    // Predicated region
    $region26: #{tpu_custom_call.1} parent=1 // pred_check
      _
    $region27: #{tpu_custom_call.1} parent=1 // pred_check_branch
      %81 = sbr.rel (0) target = $region29
    $region28: #{tpu_custom_call.1} parent=1 // pred_region
      %s83 = ssub.s32 16, 16
      %84 = vsyncadd [#allocation5], %s83
      %s86 = sshll.u32 [#allocation8], 4
      %s87 = int_to_ptr.vmem [resolvable:$true] %s86
      %89 = dma.vmem_to_hbm [thread:$0]  %s87, 16, %s2, [#allocation5]
    $region29: #{tpu_custom_call.1} parent=1 // pred_fallthru
      _
    // Predicated region
    $region30: #{tpu_custom_call.1} parent=1 // pred_check
      _
    $region31: #{tpu_custom_call.1} parent=1 // pred_check_branch
      %91 = sbr.rel (0) target = $region33
    $region32: #{tpu_custom_call.1} parent=1 // pred_region
      %92 = dma.done [#allocation5], 16
    $region33: #{tpu_custom_call.1} parent=1 // pred_fallthru
      _
    %93 = vsyncpa [#allocation4], 1
    %94 = vsyncpa [#allocation7], 1
    %95 = vsyncpa [#allocation5], 1

</llo_original>
